<compile_context>
chip_gen: v6e
topology: v6e:2x2x1
jax: 0.10.0
libtpu: 0.0.40
codegen_flags: <defaults>
</compile_context>

<pallas_src>
import functools

import jax
import jax.numpy as jnp
from jax.experimental import pallas as pl
from jax.experimental.pallas import tpu as pltpu

LANE = 128     # vreg lane width
SUBLANE = 8    # vreg sublane count (f32)


def _round_up(n: int, m: int) -> int:
    return ((n + m - 1) // m) * m


def aicanet_kernel(x_ref, w1_ref, b1_ref, w2_ref, b2_ref, w3_ref, b3_ref, o_ref):
    """Fused 3-layer MLP on one (tile_b, 128)-padded batch tile.

    x / W are bf16 (MXU operands), accumulation + bias + ReLU in f32.
    """
    x = x_ref[...]                                                      # (tb, K) bf16
    h1 = jnp.dot(x, w1_ref[...], preferred_element_type=jnp.float32) + b1_ref[...]
    h1 = jnp.maximum(h1, 0.0).astype(jnp.bfloat16)
    h2 = jnp.dot(h1, w2_ref[...], preferred_element_type=jnp.float32) + b2_ref[...]
    h2 = jnp.maximum(h2, 0.0).astype(jnp.bfloat16)
    h3 = jnp.dot(h2, w3_ref[...], preferred_element_type=jnp.float32) + b3_ref[...]
    h3 = jnp.maximum(h3, 0.0)                                           # final ReLU (as in spec)
    o_ref[...] = h3.astype(o_ref.dtype)


def aicanet_forward(x, params, *, tile_b: int = 128):
    """x: (B, in_dim) float32.  params: w1,b1,w2,b2,w3,b3 with W as (in, out)."""
    B, in_dim = x.shape
    out_dim = params["w3"].shape[1]

    # Padded (lane-dense) feature dims.
    kp = _round_up(in_dim, LANE)
    h0p = _round_up(params["w1"].shape[1], LANE)
    h1p = _round_up(params["w2"].shape[1], LANE)
    np_ = _round_up(out_dim, LANE)

    # Batch tile: fixed (<=tile_b), multiple of 8; pad batch up to a multiple.
    tb = max(SUBLANE, min(_round_up(tile_b, SUBLANE), _round_up(B, SUBLANE)))
    bp = _round_up(B, tb)

    def pad2(a, rows, cols, dtype):
        a = a.astype(dtype)
        return jnp.pad(a, ((0, rows - a.shape[0]), (0, cols - a.shape[1])))

    xp = pad2(x, bp, kp, jnp.bfloat16)
    w1 = pad2(params["w1"], kp, h0p, jnp.bfloat16)
    w2 = pad2(params["w2"], h0p, h1p, jnp.bfloat16)
    w3 = pad2(params["w3"], h1p, np_, jnp.bfloat16)
    b1 = pad2(params["b1"], 1, h0p, jnp.float32)
    b2 = pad2(params["b2"], 1, h1p, jnp.float32)
    b3 = pad2(params["b3"], 1, np_, jnp.float32)

    grid = (bp // tb,)
    # Weights/biases are tiny and constant across the grid -> same block each step.
    # TODO(synk): single-buffer these (pl.Buffered(1)) once pipeline_mode for the
    # top-level pallas_call pipeline is stable; footprint is negligible at 128-wide.
    const = lambda shape: pl.BlockSpec(shape, lambda i: (0, 0))

    out_padded = pl.pallas_call(
        aicanet_kernel,
        out_shape=jax.ShapeDtypeStruct((bp, np_), jnp.float32),
        grid_spec=pltpu.PrefetchScalarGridSpec(
            num_scalar_prefetch=0,
            grid=grid,
            in_specs=[
                pl.BlockSpec((tb, kp), lambda i: (i, 0)),   # x batch tile
                const((kp, h0p)), const((1, h0p)),
                const((h0p, h1p)), const((1, h1p)),
                const((h1p, np_)), const((1, np_)),
            ],
            out_specs=pl.BlockSpec((tb, np_), lambda i: (i, 0)),
        ),
        compiler_params=pltpu.CompilerParams(
            dimension_semantics=("parallel",),      # shard batch tiles across TCs
            vmem_limit_bytes=32 * 1024 * 1024,      # explicit, fits v7x 64 MiB w/ headroom
        ),
    )(xp, w1, b1, w2, b2, w3, b3)

    # Strip batch/feature padding.
    return out_padded[:B, :out_dim]


def init_aicanet_params(key, in_dim, hidden_dim, out_dim, dtype=jnp.float32):
    """Mirror nn.Linear default init (uniform +-1/sqrt(fan_in)); W stored (in, out)."""
    dims = [in_dim, hidden_dim[0], hidden_dim[1], out_dim]
    params = {}
    keys = jax.random.split(key, 6)
    for layer in range(3):
        fan_in, fan_out = dims[layer], dims[layer + 1]
        bound = 1.0 / jnp.sqrt(jnp.asarray(fan_in, dtype))
        params[f"w{layer + 1}"] = jax.random.uniform(
            keys[2 * layer], (fan_in, fan_out), dtype=dtype, minval=-bound, maxval=bound)
        params[f"b{layer + 1}"] = jax.random.uniform(
            keys[2 * layer + 1], (1, fan_out), dtype=dtype, minval=-bound, maxval=bound)
    return params


def aicanet_reference(x, params):
    h = jnp.maximum(x @ params["w1"] + params["b1"], 0.0)
    h = jnp.maximum(h @ params["w2"] + params["b2"], 0.0)
    h = jnp.maximum(h @ params["w3"] + params["b3"], 0.0)
    return h


if __name__ == "__main__":
    key = jax.random.PRNGKey(0)
    k_param, k_x = jax.random.split(key)

    batch = 8
    in_dim = 16
    hidden_dim = [32, 32]
    out_dim = 8

    params = init_aicanet_params(k_param, in_dim, hidden_dim, out_dim)
    x = jax.random.normal(k_x, (batch, in_dim), dtype=jnp.float32)

    fwd = jax.jit(functools.partial(aicanet_forward, tile_b=128))
    out = jax.block_until_ready(fwd(x, params))

    ref = aicanet_reference(x, params)  # full-f32 reference
    assert out.shape == (batch, out_dim), out.shape
    # bf16 matmul operands with f32 accumulation -> loose-ish tolerance vs f32 ref.
    assert jnp.allclose(out, ref, atol=5e-2, rtol=5e-2), float(jnp.max(jnp.abs(out - ref)))

    print("KERNEL_OK")
</pallas_src>

<mosaic_0001>
module attributes {stable_mosaic.version = 11 : i64} {
  func.func @aicanet_kernel(%arg0: i32, %arg1: memref<8x128xbf16, #tpu.memory_space<vmem>>, %arg2: memref<128x128xbf16, #tpu.memory_space<vmem>>, %arg3: memref<1x128xf32, #tpu.memory_space<vmem>>, %arg4: memref<128x128xbf16, #tpu.memory_space<vmem>>, %arg5: memref<1x128xf32, #tpu.memory_space<vmem>>, %arg6: memref<128x128xbf16, #tpu.memory_space<vmem>>, %arg7: memref<1x128xf32, #tpu.memory_space<vmem>>, %arg8: memref<8x128xf32, #tpu.memory_space<vmem>>) attributes {dimension_semantics = [#tpu.dimension_semantics<parallel>], iteration_bounds = array<i64: 1>, scalar_prefetch = 0 : i64, scratch_operands = 0 : i64, tpu.core_type = #tpu.core_type<tc>, window_params = [{transform_indices = @transform_0, window_bounds = array<i64: 8, 128>}, {pipeline_mode = #tpu.pipeline_mode<synchronous>, transform_indices = @transform_1, window_bounds = array<i64: 128, 128>}, {pipeline_mode = #tpu.pipeline_mode<synchronous>, transform_indices = @transform_2, window_bounds = array<i64: 1, 128>}, {pipeline_mode = #tpu.pipeline_mode<synchronous>, transform_indices = @transform_3, window_bounds = array<i64: 128, 128>}, {pipeline_mode = #tpu.pipeline_mode<synchronous>, transform_indices = @transform_4, window_bounds = array<i64: 1, 128>}, {pipeline_mode = #tpu.pipeline_mode<synchronous>, transform_indices = @transform_5, window_bounds = array<i64: 128, 128>}, {pipeline_mode = #tpu.pipeline_mode<synchronous>, transform_indices = @transform_6, window_bounds = array<i64: 1, 128>}, {transform_indices = @transform_7, window_bounds = array<i64: 8, 128>}]} {
    %c0 = arith.constant 0 : index
    %c0_0 = arith.constant 0 : index
    %0 = vector.load %arg1[%c0, %c0_0] : memref<8x128xbf16, #tpu.memory_space<vmem>>, vector<8x128xbf16>
    %c0_1 = arith.constant 0 : index
    %c0_2 = arith.constant 0 : index
    %1 = vector.load %arg2[%c0_1, %c0_2] : memref<128x128xbf16, #tpu.memory_space<vmem>>, vector<128x128xbf16>
    %cst = arith.constant dense<0.000000e+00> : vector<8x128xf32>
    %2 = tpu.matmul %0, %1, %cst {dimension_numbers = #tpu.dot_dimension_numbers<[1], [0], [0], [1], [0, 0, 1, 1], [], []>} : vector<8x128xbf16>, vector<128x128xbf16>, vector<8x128xf32> -> vector<8x128xf32>
    %c0_3 = arith.constant 0 : index
    %c0_4 = arith.constant 0 : index
    %3 = vector.load %arg3[%c0_3, %c0_4] : memref<1x128xf32, #tpu.memory_space<vmem>>, vector<1x128xf32>
    %4 = vector.broadcast %3 : vector<1x128xf32> to vector<8x128xf32>
    %5 = arith.addf %2, %4 : vector<8x128xf32>
    %cst_5 = arith.constant 0.000000e+00 : f32
    %6 = vector.broadcast %cst_5 : f32 to vector<8x128xf32>
    %7 = arith.maximumf %5, %6 : vector<8x128xf32>
    %8 = arith.truncf %7 : vector<8x128xf32> to vector<8x128xbf16>
    %c0_6 = arith.constant 0 : index
    %c0_7 = arith.constant 0 : index
    %9 = vector.load %arg4[%c0_6, %c0_7] : memref<128x128xbf16, #tpu.memory_space<vmem>>, vector<128x128xbf16>
    %cst_8 = arith.constant dense<0.000000e+00> : vector<8x128xf32>
    %10 = tpu.matmul %8, %9, %cst_8 {dimension_numbers = #tpu.dot_dimension_numbers<[1], [0], [0], [1], [0, 0, 1, 1], [], []>} : vector<8x128xbf16>, vector<128x128xbf16>, vector<8x128xf32> -> vector<8x128xf32>
    %c0_9 = arith.constant 0 : index
    %c0_10 = arith.constant 0 : index
    %11 = vector.load %arg5[%c0_9, %c0_10] : memref<1x128xf32, #tpu.memory_space<vmem>>, vector<1x128xf32>
    %12 = vector.broadcast %11 : vector<1x128xf32> to vector<8x128xf32>
    %13 = arith.addf %10, %12 : vector<8x128xf32>
    %cst_11 = arith.constant 0.000000e+00 : f32
    %14 = vector.broadcast %cst_11 : f32 to vector<8x128xf32>
    %15 = arith.maximumf %13, %14 : vector<8x128xf32>
    %16 = arith.truncf %15 : vector<8x128xf32> to vector<8x128xbf16>
    %c0_12 = arith.constant 0 : index
    %c0_13 = arith.constant 0 : index
    %17 = vector.load %arg6[%c0_12, %c0_13] : memref<128x128xbf16, #tpu.memory_space<vmem>>, vector<128x128xbf16>
    %cst_14 = arith.constant dense<0.000000e+00> : vector<8x128xf32>
    %18 = tpu.matmul %16, %17, %cst_14 {dimension_numbers = #tpu.dot_dimension_numbers<[1], [0], [0], [1], [0, 0, 1, 1], [], []>} : vector<8x128xbf16>, vector<128x128xbf16>, vector<8x128xf32> -> vector<8x128xf32>
    %c0_15 = arith.constant 0 : index
    %c0_16 = arith.constant 0 : index
    %19 = vector.load %arg7[%c0_15, %c0_16] : memref<1x128xf32, #tpu.memory_space<vmem>>, vector<1x128xf32>
    %20 = vector.broadcast %19 : vector<1x128xf32> to vector<8x128xf32>
    %21 = arith.addf %18, %20 : vector<8x128xf32>
    %cst_17 = arith.constant 0.000000e+00 : f32
    %22 = vector.broadcast %cst_17 : f32 to vector<8x128xf32>
    %23 = arith.maximumf %21, %22 : vector<8x128xf32>
    %c0_18 = arith.constant 0 : index
    %c0_19 = arith.constant 0 : index
    %24 = vector.load %arg8[%c0_18, %c0_19] : memref<8x128xf32, #tpu.memory_space<vmem>>, vector<8x128xf32>
    tpu.vector_store %arg8[%c0_18, %c0_19], %23 {strides = array<i32>} : memref<8x128xf32, #tpu.memory_space<vmem>>, vector<8x128xf32>,
    return
  }
  func.func @transform_0(%arg0: i32) -> (i32, i32) {
    %c0_i32 = arith.constant 0 : i32
    %c0_i32_0 = arith.constant 0 : i32
    return %arg0, %c0_i32 : i32, i32
  }
  func.func @transform_1(%arg0: i32) -> (i32, i32) {
    %c0_i32 = arith.constant 0 : i32
    %c0_i32_0 = arith.constant 0 : i32
    %c0_i32_1 = arith.constant 0 : i32
    return %c0_i32, %c0_i32_0 : i32, i32
  }
  func.func @transform_2(%arg0: i32) -> (i32, i32) {
    %c0_i32 = arith.constant 0 : i32
    %c0_i32_0 = arith.constant 0 : i32
    %c0_i32_1 = arith.constant 0 : i32
    return %c0_i32, %c0_i32_0 : i32, i32
  }
  func.func @transform_3(%arg0: i32) -> (i32, i32) {
    %c0_i32 = arith.constant 0 : i32
    %c0_i32_0 = arith.constant 0 : i32
    %c0_i32_1 = arith.constant 0 : i32
    return %c0_i32, %c0_i32_0 : i32, i32
  }
  func.func @transform_4(%arg0: i32) -> (i32, i32) {
    %c0_i32 = arith.constant 0 : i32
    %c0_i32_0 = arith.constant 0 : i32
    %c0_i32_1 = arith.constant 0 : i32
    return %c0_i32, %c0_i32_0 : i32, i32
  }
  func.func @transform_5(%arg0: i32) -> (i32, i32) {
    %c0_i32 = arith.constant 0 : i32
    %c0_i32_0 = arith.constant 0 : i32
    %c0_i32_1 = arith.constant 0 : i32
    return %c0_i32, %c0_i32_0 : i32, i32
  }
  func.func @transform_6(%arg0: i32) -> (i32, i32) {
    %c0_i32 = arith.constant 0 : i32
    %c0_i32_0 = arith.constant 0 : i32
    %c0_i32_1 = arith.constant 0 : i32
    return %c0_i32, %c0_i32_0 : i32, i32
  }
  func.func @transform_7(%arg0: i32) -> (i32, i32) {
    %c0_i32 = arith.constant 0 : i32
    %c0_i32_0 = arith.constant 0 : i32
    return %arg0, %c0_i32 : i32, i32
  }
}

</mosaic_0001>

<llo_original>
// kernel: aicanet_forward.1
$region0: #{aicanet_forward.1}
  #allocation0 [shape = 'u32[]', space=smem, size = 0x4, offset = 0x4, fixed_abs, tag = 'smem constant byte address 0x4 - core index']
  #allocation1 [shape = 'u32[144,128]{1,0:T(1,128)}', space=vmem, size = 0x12000, scoped, tag = 'internal scratch']
  %s0 = inlined_call_operand.vmem [shape: bf16[8,128], index: 0, kind: input, shape index: {}]
  %s1 = inlined_call_operand.vmem [shape: bf16[128,128], index: 1, kind: input, shape index: {}]
  %s2 = inlined_call_operand.vmem [shape: f32[1,128], index: 2, kind: input, shape index: {}]
  %s3 = inlined_call_operand.vmem [shape: bf16[128,128], index: 3, kind: input, shape index: {}]
  %s4 = inlined_call_operand.vmem [shape: f32[1,128], index: 4, kind: input, shape index: {}]
  %s5 = inlined_call_operand.vmem [shape: bf16[128,128], index: 5, kind: input, shape index: {}]
  %s6 = inlined_call_operand.vmem [shape: f32[1,128], index: 6, kind: input, shape index: {}]
  %s7 = inlined_call_operand.hbm [shape: f32[8,128], index: 7, kind: output, shape index: {}]
  %s8 = sld [smem:[#allocation0]]
  $region38: #{aicanet_forward.1} parent=0
    _
  %s10 = ssub.s32 1, %s8
  %s11 = scalar_select 0, %s10, %s8
  $region1: #{aicanet_forward.1} parent=0
    #allocation2 [shape = 'u8[4096]{0}', space=vmem, size = 0x1000, scoped, tag = 'output window, operand 0, single buffered']
    #allocation3 [shape = 's32[1]{0}', space=sflag, size = 0x4, scoped, tag = 'scoped memory for aicanet_forward.1']
    %12 = vsyncpa [#allocation3], 0
    // Predicated region
    $region2: #{aicanet_forward.1} parent=1 // pred_check
      _
    $region3: #{aicanet_forward.1} parent=1 // pred_check_branch
      %14 = sbr.rel (0) target = $region5
    $region4: #{aicanet_forward.1} parent=1 // pred_region
      _
    $region5: #{aicanet_forward.1} parent=1 // pred_fallthru
      _
    // Predicated region
    $region6: #{aicanet_forward.1} parent=1 // pred_check
      _
    $region7: #{aicanet_forward.1} parent=1 // pred_check_branch
      %16 = sbr.rel (0) target = $region9
    $region8: #{aicanet_forward.1} parent=1 // pred_region
      _
    $region9: #{aicanet_forward.1} parent=1 // pred_fallthru
      _
    // Predicated region
    $region10: #{aicanet_forward.1} parent=1 // pred_check
      _
    $region11: #{aicanet_forward.1} parent=1 // pred_check_branch
      %18 = sbr.rel (0) target = $region13
    $region12: #{aicanet_forward.1} parent=1 // pred_region
      _
    $region13: #{aicanet_forward.1} parent=1 // pred_fallthru
      _
    // Predicated region
    $region14: #{aicanet_forward.1} parent=1 // pred_check
      _
    $region15: #{aicanet_forward.1} parent=1 // pred_check_branch
      %20 = sbr.rel (0) target = $region17
    $region16: #{aicanet_forward.1} parent=1 // pred_region
      _
    $region17: #{aicanet_forward.1} parent=1 // pred_fallthru
      _
    // Predicated region
    $region18: #{aicanet_forward.1} parent=1 // pred_check
      _
    $region19: #{aicanet_forward.1} parent=1 // pred_check_branch
      %22 = sbr.rel (0) target = $region21
    $region20: #{aicanet_forward.1} parent=1 // pred_region
      _
    $region21: #{aicanet_forward.1} parent=1 // pred_fallthru
      _
    // Predicated region
    $region22: #{aicanet_forward.1} parent=1 // pred_check
      _
    $region23: #{aicanet_forward.1} parent=1 // pred_check_branch
      %24 = sbr.rel (0) target = $region25
    $region24: #{aicanet_forward.1} parent=1 // pred_region
      _
    $region25: #{aicanet_forward.1} parent=1 // pred_fallthru
      _
    // Predicated region
    $region26: #{aicanet_forward.1} parent=1 // pred_check
      _
    $region27: #{aicanet_forward.1} parent=1 // pred_check_branch
      %26 = sbr.rel (0) target = $region29
    $region28: #{aicanet_forward.1} parent=1 // pred_region
      _
    $region29: #{aicanet_forward.1} parent=1 // pred_fallthru
      _
    %v28 = vld [vmem:[%s0] sm:$0xf]
    %v29 = vld [vmem:[%s1] sm:$0xf]
    %v30 = vld [vmem:[%s1 + $0x4] sm:$0xf]
    %v31 = vld [vmem:[%s1 + $0x8] sm:$0xf]
    %v32 = vld [vmem:[%s1 + $0xc] sm:$0xf]
    %v33 = vld [vmem:[%s1 + $0x10] sm:$0xf]
    %v34 = vld [vmem:[%s1 + $0x14] sm:$0xf]
    %v35 = vld [vmem:[%s1 + $0x18] sm:$0xf]
    %v36 = vld [vmem:[%s1 + $0x1c] sm:$0xf]
    %v37 = vld [vmem:[%s1 + $0x20] sm:$0xf]
    %v38 = vld [vmem:[%s1 + $0x24] sm:$0xf]
    %v39 = vld [vmem:[%s1 + $0x28] sm:$0xf]
    %v40 = vld [vmem:[%s1 + $0x2c] sm:$0xf]
    %v41 = vld [vmem:[%s1 + $0x30] sm:$0xf]
    %v42 = vld [vmem:[%s1 + $0x34] sm:$0xf]
    %v43 = vld [vmem:[%s1 + $0x38] sm:$0xf]
    %v44 = vld [vmem:[%s1 + $0x3c] sm:$0xf]
    %v45 = vld [vmem:[%s2] sm:$0x1]
    %v47 = vlaneseq
    %v48 = vshrl.u32 %v47, 7
    %v49 = vsub.s32 0, %v48
    %v50 = vrot.slane %v45, %v49
    %v68 = vunpack.c.l.b16 %v29
    %v69 = vunpack.c.l.b16 %v30
    %v70 = vunpack.c.l.b16 %v31
    %v71 = vunpack.c.l.b16 %v32
    %v72 = vunpack.c.l.b16 %v33
    %v73 = vunpack.c.l.b16 %v34
    %v74 = vunpack.c.l.b16 %v35
    %v75 = vunpack.c.l.b16 %v36
    %v76 = vunpack.c.l.b16 %v37
    %v77 = vunpack.c.l.b16 %v38
    %v78 = vunpack.c.l.b16 %v39
    %v79 = vunpack.c.l.b16 %v40
    %v80 = vunpack.c.l.b16 %v41
    %v81 = vunpack.c.l.b16 %v42
    %v82 = vunpack.c.l.b16 %v43
    %v83 = vunpack.c.l.b16 %v44
    %v84 = vpack.c.b16 %v69, %v68
    %v85 = vpack.c.b16 %v71, %v70
    %v86 = vpack.c.b16 %v73, %v72
    %v87 = vpack.c.b16 %v75, %v74
    %v88 = vpack.c.b16 %v77, %v76
    %v89 = vpack.c.b16 %v79, %v78
    %v90 = vpack.c.b16 %v81, %v80
    %v91 = vpack.c.b16 %v83, %v82
    %100 = vmatprep.subr.bf16.mxu0 0
    %101 = vmatpush1.bf16.msra.mxu0 %v91
    %102 = vmatprep.subr.bf16.mxu0 0
    %103 = vmatpush1.bf16.msra.mxu0 %v90
    %104 = vmatprep.subr.bf16.mxu0 0
    %105 = vmatpush1.bf16.msra.mxu0 %v89
    %106 = vmatprep.subr.bf16.mxu0 0
    %107 = vmatpush1.bf16.msra.mxu0 %v88
    %108 = vmatprep.subr.bf16.mxu0 0
    %109 = vmatpush1.bf16.msra.mxu0 %v87
    %110 = vmatprep.subr.bf16.mxu0 0
    %111 = vmatpush1.bf16.msra.mxu0 %v86
    %112 = vmatprep.subr.bf16.mxu0 0
    %113 = vmatpush1.bf16.msra.mxu0 %v85
    %114 = vmatprep.subr.bf16.mxu0 0
    %115 = vmatpush1.bf16.msra.mxu0 %v84
    %116 = vmatprep.subr.bf16.mxu0 0
    %117 = vmatpush2.bf16.msra.mxu0 0
    %118 = vmatprep.subr.bf16.mxu0 0
    %119 = vmatpush2.bf16.msra.mxu0 0
    %120 = vmatprep.subr.bf16.mxu0 0
    %121 = vmatpush2.bf16.msra.mxu0 0
    %122 = vmatprep.subr.bf16.mxu0 0
    %123 = vmatpush2.bf16.msra.mxu0 0
    %124 = vmatprep.subr.bf16.mxu0 0
    %125 = vmatpush2.bf16.msra.mxu0 0
    %126 = vmatprep.subr.bf16.mxu0 0
    %127 = vmatpush2.bf16.msra.mxu0 0
    %128 = vmatprep.subr.bf16.mxu0 0
    %129 = vmatpush2.bf16.msra.mxu0 0
    %130 = vmatprep.subr.bf16.mxu0 0
    %131 = vmatpush2.bf16.msra.mxu0 0
    %132 = vmatprep.mubr.bf16.mxu0 0
    %133 = vmatmul.mubr.bf16.gmra.mxu0 %v28
    %v134 = vpop.f32.mrf.mxu0
    %v135 = vadd.f32 %v50, %v134
    %v136 = vpop.f32.mrf.mxu0
    %v137 = vpop.f32.mrf.mxu0
    %v138 = vpop.f32.mrf.mxu0
    %139 = vdwg.mxu0
    %v140 = vmax.f32 %v135, 0.0
    %v141 = vpack.c.bf16 %v140, %v140
    %v142 = vld [vmem:[%s3] sm:$0xf]
    %v143 = vld [vmem:[%s3 + $0x4] sm:$0xf]
    %v144 = vld [vmem:[%s3 + $0x8] sm:$0xf]
    %v145 = vld [vmem:[%s3 + $0xc] sm:$0xf]
    %v146 = vld [vmem:[%s3 + $0x10] sm:$0xf]
    %v147 = vld [vmem:[%s3 + $0x14] sm:$0xf]
    %v148 = vld [vmem:[%s3 + $0x18] sm:$0xf]
    %v149 = vld [vmem:[%s3 + $0x1c] sm:$0xf]
    %v150 = vld [vmem:[%s3 + $0x20] sm:$0xf]
    %v151 = vld [vmem:[%s3 + $0x24] sm:$0xf]
    %v152 = vld [vmem:[%s3 + $0x28] sm:$0xf]
    %v153 = vld [vmem:[%s3 + $0x2c] sm:$0xf]
    %v154 = vld [vmem:[%s3 + $0x30] sm:$0xf]
    %v155 = vld [vmem:[%s3 + $0x34] sm:$0xf]
    %v156 = vld [vmem:[%s3 + $0x38] sm:$0xf]
    %v157 = vld [vmem:[%s3 + $0x3c] sm:$0xf]
    %v158 = vld [vmem:[%s4] sm:$0x1]
    %v160 = vlaneseq
    %v161 = vshrl.u32 %v160, 7
    %v162 = vsub.s32 0, %v161
    %v163 = vrot.slane %v158, %v162
    %v181 = vunpack.c.l.b16 %v142
    %v182 = vunpack.c.l.b16 %v143
    %v183 = vunpack.c.l.b16 %v144
    %v184 = vunpack.c.l.b16 %v145
    %v185 = vunpack.c.l.b16 %v146
    %v186 = vunpack.c.l.b16 %v147
    %v187 = vunpack.c.l.b16 %v148
    %v188 = vunpack.c.l.b16 %v149
    %v189 = vunpack.c.l.b16 %v150
    %v190 = vunpack.c.l.b16 %v151
    %v191 = vunpack.c.l.b16 %v152
    %v192 = vunpack.c.l.b16 %v153
    %v193 = vunpack.c.l.b16 %v154
    %v194 = vunpack.c.l.b16 %v155
    %v195 = vunpack.c.l.b16 %v156
    %v196 = vunpack.c.l.b16 %v157
    %v197 = vpack.c.b16 %v182, %v181
    %v198 = vpack.c.b16 %v184, %v183
    %v199 = vpack.c.b16 %v186, %v185
    %v200 = vpack.c.b16 %v188, %v187
    %v201 = vpack.c.b16 %v190, %v189
    %v202 = vpack.c.b16 %v192, %v191
    %v203 = vpack.c.b16 %v194, %v193
    %v204 = vpack.c.b16 %v196, %v195
    %213 = vmatprep.subr.bf16.mxu0 0
    %214 = vmatpush1.bf16.msra.mxu0 %v204
    %215 = vmatprep.subr.bf16.mxu0 0
    %216 = vmatpush1.bf16.msra.mxu0 %v203
    %217 = vmatprep.subr.bf16.mxu0 0
    %218 = vmatpush1.bf16.msra.mxu0 %v202
    %219 = vmatprep.subr.bf16.mxu0 0
    %220 = vmatpush1.bf16.msra.mxu0 %v201
    %221 = vmatprep.subr.bf16.mxu0 0
    %222 = vmatpush1.bf16.msra.mxu0 %v200
    %223 = vmatprep.subr.bf16.mxu0 0
    %224 = vmatpush1.bf16.msra.mxu0 %v199
    %225 = vmatprep.subr.bf16.mxu0 0
    %226 = vmatpush1.bf16.msra.mxu0 %v198
    %227 = vmatprep.subr.bf16.mxu0 0
    %228 = vmatpush1.bf16.msra.mxu0 %v197
    %229 = vmatprep.subr.bf16.mxu0 0
    %230 = vmatpush2.bf16.msra.mxu0 0
    %231 = vmatprep.subr.bf16.mxu0 0
    %232 = vmatpush2.bf16.msra.mxu0 0
    %233 = vmatprep.subr.bf16.mxu0 0
    %234 = vmatpush2.bf16.msra.mxu0 0
    %235 = vmatprep.subr.bf16.mxu0 0
    %236 = vmatpush2.bf16.msra.mxu0 0
    %237 = vmatprep.subr.bf16.mxu0 0
    %238 = vmatpush2.bf16.msra.mxu0 0
    %239 = vmatprep.subr.bf16.mxu0 0
    %240 = vmatpush2.bf16.msra.mxu0 0
    %241 = vmatprep.subr.bf16.mxu0 0
    %242 = vmatpush2.bf16.msra.mxu0 0
    %243 = vmatprep.subr.bf16.mxu0 0
    %244 = vmatpush2.bf16.msra.mxu0 0
    %245 = vmatprep.mubr.bf16.mxu0 0
    %246 = vmatmul.mubr.bf16.gmra.mxu0 %v141
    %v247 = vpop.f32.mrf.mxu0
    %v248 = vadd.f32 %v163, %v247
    %v249 = vpop.f32.mrf.mxu0
    %v250 = vpop.f32.mrf.mxu0
    %v251 = vpop.f32.mrf.mxu0
    %252 = vdwg.mxu0
    %v253 = vmax.f32 %v248, 0.0
    %v254 = vpack.c.bf16 %v253, %v253
    %v255 = vld [vmem:[%s5] sm:$0xf]
    %v256 = vld [vmem:[%s5 + $0x4] sm:$0xf]
    %v257 = vld [vmem:[%s5 + $0x8] sm:$0xf]
    %v258 = vld [vmem:[%s5 + $0xc] sm:$0xf]
    %v259 = vld [vmem:[%s5 + $0x10] sm:$0xf]
    %v260 = vld [vmem:[%s5 + $0x14] sm:$0xf]
    %v261 = vld [vmem:[%s5 + $0x18] sm:$0xf]
    %v262 = vld [vmem:[%s5 + $0x1c] sm:$0xf]
    %v263 = vld [vmem:[%s5 + $0x20] sm:$0xf]
    %v264 = vld [vmem:[%s5 + $0x24] sm:$0xf]
    %v265 = vld [vmem:[%s5 + $0x28] sm:$0xf]
    %v266 = vld [vmem:[%s5 + $0x2c] sm:$0xf]
    %v267 = vld [vmem:[%s5 + $0x30] sm:$0xf]
    %v268 = vld [vmem:[%s5 + $0x34] sm:$0xf]
    %v269 = vld [vmem:[%s5 + $0x38] sm:$0xf]
    %v270 = vld [vmem:[%s5 + $0x3c] sm:$0xf]
    %v271 = vld [vmem:[%s6] sm:$0x1]
    %v273 = vlaneseq
    %v274 = vshrl.u32 %v273, 7
    %v275 = vsub.s32 0, %v274
    %v276 = vrot.slane %v271, %v275
    %v294 = vunpack.c.l.b16 %v255
    %v295 = vunpack.c.l.b16 %v256
    %v296 = vunpack.c.l.b16 %v257
    %v297 = vunpack.c.l.b16 %v258
    %v298 = vunpack.c.l.b16 %v259
    %v299 = vunpack.c.l.b16 %v260
    %v300 = vunpack.c.l.b16 %v261
    %v301 = vunpack.c.l.b16 %v262
    %v302 = vunpack.c.l.b16 %v263
    %v303 = vunpack.c.l.b16 %v264
    %v304 = vunpack.c.l.b16 %v265
    %v305 = vunpack.c.l.b16 %v266
    %v306 = vunpack.c.l.b16 %v267
    %v307 = vunpack.c.l.b16 %v268
    %v308 = vunpack.c.l.b16 %v269
    %v309 = vunpack.c.l.b16 %v270
    %v310 = vpack.c.b16 %v295, %v294
    %v311 = vpack.c.b16 %v297, %v296
    %v312 = vpack.c.b16 %v299, %v298
    %v313 = vpack.c.b16 %v301, %v300
    %v314 = vpack.c.b16 %v303, %v302
    %v315 = vpack.c.b16 %v305, %v304
    %v316 = vpack.c.b16 %v307, %v306
    %v317 = vpack.c.b16 %v309, %v308
    %326 = vmatprep.subr.bf16.mxu0 0
    %327 = vmatpush1.bf16.msra.mxu0 %v317
    %328 = vmatprep.subr.bf16.mxu0 0
    %329 = vmatpush1.bf16.msra.mxu0 %v316
    %330 = vmatprep.subr.bf16.mxu0 0
    %331 = vmatpush1.bf16.msra.mxu0 %v315
    %332 = vmatprep.subr.bf16.mxu0 0
    %333 = vmatpush1.bf16.msra.mxu0 %v314
    %334 = vmatprep.subr.bf16.mxu0 0
    %335 = vmatpush1.bf16.msra.mxu0 %v313
    %336 = vmatprep.subr.bf16.mxu0 0
    %337 = vmatpush1.bf16.msra.mxu0 %v312
    %338 = vmatprep.subr.bf16.mxu0 0
    %339 = vmatpush1.bf16.msra.mxu0 %v311
    %340 = vmatprep.subr.bf16.mxu0 0
    %341 = vmatpush1.bf16.msra.mxu0 %v310
    %342 = vmatprep.subr.bf16.mxu0 0
    %343 = vmatpush2.bf16.msra.mxu0 0
    %344 = vmatprep.subr.bf16.mxu0 0
    %345 = vmatpush2.bf16.msra.mxu0 0
    %346 = vmatprep.subr.bf16.mxu0 0
    %347 = vmatpush2.bf16.msra.mxu0 0
    %348 = vmatprep.subr.bf16.mxu0 0
    %349 = vmatpush2.bf16.msra.mxu0 0
    %350 = vmatprep.subr.bf16.mxu0 0
    %351 = vmatpush2.bf16.msra.mxu0 0
    %352 = vmatprep.subr.bf16.mxu0 0
    %353 = vmatpush2.bf16.msra.mxu0 0
    %354 = vmatprep.subr.bf16.mxu0 0
    %355 = vmatpush2.bf16.msra.mxu0 0
    %356 = vmatprep.subr.bf16.mxu0 0
    %357 = vmatpush2.bf16.msra.mxu0 0
    %358 = vmatprep.mubr.bf16.mxu0 0
    %359 = vmatmul.mubr.bf16.gmra.mxu0 %v254
    %v360 = vpop.f32.mrf.mxu0
    %v361 = vadd.f32 %v276, %v360
    %v362 = vpop.f32.mrf.mxu0
    %v363 = vpop.f32.mrf.mxu0
    %v364 = vpop.f32.mrf.mxu0
    %365 = vdwg.mxu0
    %v366 = vmax.f32 %v361, 0.0
    %367 = vst [vmem:[#allocation2] sm:$0xff] %v366
    // Predicated region
    $region30: #{aicanet_forward.1} parent=1 // pred_check
      _
    $region31: #{aicanet_forward.1} parent=1 // pred_check_branch
      %369 = sbr.rel (0) target = $region33
    $region32: #{aicanet_forward.1} parent=1 // pred_region
      %s371 = ssub.s32 128, 128
      %372 = vsyncadd [#allocation3], %s371
      %s374 = sshll.u32 [#allocation2], 4
      %s375 = int_to_ptr.vmem [resolvable:$true] %s374
      %377 = dma.vmem_to_hbm [thread:$0]  %s375, 128, %s7, [#allocation3]
    $region33: #{aicanet_forward.1} parent=1 // pred_fallthru
      _
    // Predicated region
    $region34: #{aicanet_forward.1} parent=1 // pred_check
      _
    $region35: #{aicanet_forward.1} parent=1 // pred_check_branch
      %379 = sbr.rel (0) target = $region37
    $region36: #{aicanet_forward.1} parent=1 // pred_region
      %380 = dma.done [#allocation3], 128
    $region37: #{aicanet_forward.1} parent=1 // pred_fallthru
      _
    %381 = vsyncpa [#allocation3], 1

</llo_original>
